<compile_context>
chip_gen: v6e
topology: v6e:2x2x1
jax: 0.10.0
libtpu: 0.0.40
codegen_flags: <defaults>
</compile_context>

<pallas_src>
import functools

import jax
import jax.numpy as jnp
from jax.experimental import pallas as pl
from jax.experimental.pallas import tpu as pltpu

_NEG_INF = -1e30  # pad-class bias: exp() underflows to exactly 0 in f32


def _round_up(x, m):
    return ((x + m - 1) // m) * m


def _pad_cast_2d(a, rows, cols, dtype, fill=0.0):
    """Cast to `dtype` and pad to (rows, cols); no copy is forced if aligned."""
    r, c = a.shape
    a = a.astype(dtype)
    if r == rows and c == cols:
        return a
    out = jnp.full((rows, cols), fill, dtype)
    return out.at[:r, :c].set(a)


def prepare_linear_params(w, b, *, tile_k=256, tile_c=512,
                          param_dtype=jnp.bfloat16):
    """Transpose / pad / cast the nn.Linear params once (hoisted out of the hot path).

    w: (C, D) PyTorch nn.Linear layout, b: (C,).  Returns a dict reusable across
    cross_entropy_model calls.
    """
    C, D = w.shape
    TK = min(tile_k, _round_up(D, 128))      # K tile (multiple of 128)
    Dp = _round_up(D, TK)                    # Dp % TK == 0 -> no TK=128 fallback
    TC = min(tile_c, _round_up(C, 128))      # class (lane) tile
    Cp = _round_up(C, TC)
    # pre-transposed (D, C): MXU RHS layout, class dim on lanes, bf16 operands
    w_t = _pad_cast_2d(w.T, Dp, Cp, param_dtype)
    # padded classes get a very negative bias -> exp underflows to exactly 0
    b_p = _pad_cast_2d(b.reshape(1, C), 1, Cp, jnp.float32, fill=_NEG_INF)
    return dict(w_t=w_t, b_p=b_p, n_classes=C, n_features=D, TK=TK, TC=TC)


def _softmax_kernel(x_ref, w_ref, b_ref, o_ref, acc_ref):
    """grid = (batch_tiles, k_tiles); logits accumulated over k, softmax at k==last."""
    k = pl.program_id(1)

    @pl.when(k == 0)
    def _():
        acc_ref[...] = jnp.zeros_like(acc_ref)

    # bf16 (TB, TK) @ bf16 (TK, Cp) -> f32 accumulate on the MXU
    acc_ref[...] += jnp.dot(x_ref[...], w_ref[...],
                            preferred_element_type=jnp.float32)

    @pl.when(k == pl.num_programs(1) - 1)
    def _():
        logits = acc_ref[...] + b_ref[...]               # (TB, Cp) f32
        m = jnp.max(logits, axis=-1, keepdims=True)
        e = jnp.exp(logits - m)                          # padded classes -> 0
        denom = jnp.sum(e, axis=-1, keepdims=True)
        # exact divide: rows must sum to 1 (approx vrcp failed that check)
        o_ref[...] = (e / denom).astype(o_ref.dtype)


def _ce_loss_kernel(t_ref, x_ref, w_ref, b_ref, o_ref,
                    acc_ref, m_ref, l_ref, tgt_ref, *, n_valid):
    """grid = (batch_tiles, class_tiles, k_tiles).

    Online (flash-style) log-sum-exp over class tiles; each batch tile writes its
    own partial loss sum, so the batch axis can be 'parallel'.
    """
    i = pl.program_id(0)       # batch tile   ("parallel")
    j = pl.program_id(1)       # class tile   ("arbitrary")
    k = pl.program_id(2)       # feature tile ("arbitrary")
    nj = pl.num_programs(1)
    nk = pl.num_programs(2)

    @pl.when(jnp.logical_and(j == 0, k == 0))
    def _():
        m_ref[...] = jnp.full_like(m_ref, _NEG_INF)
        l_ref[...] = jnp.zeros_like(l_ref)
        tgt_ref[...] = jnp.zeros_like(tgt_ref)

    @pl.when(k == 0)
    def _():
        acc_ref[...] = jnp.zeros_like(acc_ref)

    acc_ref[...] += jnp.dot(x_ref[...], w_ref[...],
                            preferred_element_type=jnp.float32)

    @pl.when(k == nk - 1)
    def _():
        logits = acc_ref[...] + b_ref[...]               # (TB, TC) f32
        tb, tc = logits.shape
        # online max / sum-exp update (padded classes are -1e30 -> exp == 0)
        m_new = jnp.maximum(m_ref[...], jnp.max(logits, axis=-1, keepdims=True))
        alpha = jnp.exp(m_ref[...] - m_new)
        l_ref[...] = alpha * l_ref[...] + jnp.sum(jnp.exp(logits - m_new),
                                                  axis=-1, keepdims=True)
        m_ref[...] = m_new
        # target logit via select + reduce; (1, TC) iota broadcast vs (TB, 1) targets
        cls = j * tc + jax.lax.broadcasted_iota(jnp.int32, (1, tc), 1)
        tgt_ref[...] += jnp.sum(jnp.where(cls == t_ref[...], logits, 0.0),
                                axis=-1, keepdims=True)

        @pl.when(j == nj - 1)
        def _():
            lse = m_ref[...] + jnp.log(l_ref[...])       # (TB, 1)
            row_ids = i * tb + jax.lax.broadcasted_iota(jnp.int32, (tb, 1), 0)
            per_row = jnp.where(row_ids < n_valid, lse - tgt_ref[...], 0.0)
            # per-batch-tile partial sum, broadcast into one lane-dense tile
            o_ref[...] = jnp.zeros_like(o_ref) + jnp.sum(per_row)


def cross_entropy_model(x, w=None, b=None, target=None, *, params=None,
                        tile_b=256, tile_k=256, tile_c=512,
                        probs_dtype=jnp.float32):
    """JAX/Pallas equivalent of CrossEntropyModel.forward.

    x: (B, D); w: (C, D) (PyTorch nn.Linear layout); b: (C,);
    target: optional (B,) int class ids.
    Pass params=prepare_linear_params(w, b) to amortize weight prep across calls.
    """
    if params is None:
        params = prepare_linear_params(w, b, tile_k=tile_k, tile_c=tile_c)
    w_t, b_p = params["w_t"], params["b_p"]
    C = params["n_classes"]
    TK, TC = params["TK"], params["TC"]
    Dp, Cp = w_t.shape
    in_dtype = w_t.dtype
    in_bytes = jnp.dtype(in_dtype).itemsize

    B = x.shape[0]
    TB = min(tile_b, _round_up(B, 8))   # 256 fills the v6e/v7x MXU; use 128 on v5e
    Bp = _round_up(B, TB)
    x_p = _pad_cast_2d(x, Bp, Dp, in_dtype)

    nb, nk, ncls = Bp // TB, Dp // TK, Cp // TC

    if target is None:
        # ---- softmax path (full padded class dim per batch tile) ----
        est = (2 * TB * TK * in_bytes          # x blocks (double-buffered)
               + 2 * TK * Cp * in_bytes        # weight blocks
               + 2 * Cp * 4                    # bias
               + 2 * TB * Cp * jnp.dtype(probs_dtype).itemsize   # output blocks
               + TB * Cp * 4)                  # f32 accumulator scratch
        vmem_limit = int(min(max(2 * est, 32 * 1024 * 1024), 64 * 1024 * 1024))
        out = pl.pallas_call(
            _softmax_kernel,
            out_shape=jax.ShapeDtypeStruct((Bp, Cp), probs_dtype),
            grid=(nb, nk),
            in_specs=[pl.BlockSpec((TB, TK), lambda i, k: (i, k)),
                      pl.BlockSpec((TK, Cp), lambda i, k: (k, 0)),
                      pl.BlockSpec((1, Cp), lambda i, k: (0, 0))],
            out_specs=pl.BlockSpec((TB, Cp), lambda i, k: (i, 0)),
            scratch_shapes=[pltpu.VMEM((TB, Cp), jnp.float32)],
            compiler_params=pltpu.CompilerParams(
                dimension_semantics=("parallel", "arbitrary"),
                vmem_limit_bytes=vmem_limit),
        )(x_p, w_t, b_p)
        return out[:B, :C]

    # ---- cross-entropy loss path (class-tiled online log-sum-exp) ----
    t_p = jnp.zeros((Bp, 1), jnp.int32).at[:B, 0].set(target.astype(jnp.int32))
    est = (2 * TB * TK * in_bytes + 2 * TK * TC * in_bytes + 2 * TC * 4
           + 2 * TB * 4                        # target blocks
           + 2 * 8 * 128 * 4                   # partial-sum output blocks
           + TB * TC * 4 + 3 * TB * 4)         # scratches
    vmem_limit = int(min(max(2 * est, 32 * 1024 * 1024), 64 * 1024 * 1024))
    kernel = functools.partial(_ce_loss_kernel, n_valid=B)
    partial = pl.pallas_call(
        kernel,
        out_shape=jax.ShapeDtypeStruct((nb, 8, 128), jnp.float32),
        grid=(nb, ncls, nk),
        in_specs=[pl.BlockSpec((TB, 1), lambda i, j, k: (i, 0)),
                  pl.BlockSpec((TB, TK), lambda i, j, k: (i, k)),
                  pl.BlockSpec((TK, TC), lambda i, j, k: (k, j)),
                  pl.BlockSpec((1, TC), lambda i, j, k: (0, j))],
        out_specs=pl.BlockSpec((1, 8, 128), lambda i, j, k: (i, 0, 0)),
        scratch_shapes=[pltpu.VMEM((TB, TC), jnp.float32),   # logits accumulator
                        pltpu.VMEM((TB, 1), jnp.float32),    # running max
                        pltpu.VMEM((TB, 1), jnp.float32),    # running sum-exp
                        pltpu.VMEM((TB, 1), jnp.float32)],   # target logit
        compiler_params=pltpu.CompilerParams(
            dimension_semantics=("parallel", "arbitrary", "arbitrary"),
            vmem_limit_bytes=vmem_limit),
    )(t_p, x_p, w_t, b_p)
    # tiny final reduction (mean over the real batch) in plain JAX
    return jnp.sum(partial[:, 0, 0]) / B


if __name__ == "__main__":
    # small shapes consistent with the module (hidden_size unused by forward)
    batch, input_size, hidden_size, output_size = 8, 32, 16, 10

    key = jax.random.PRNGKey(0)
    kx, kw, kb, kt = jax.random.split(key, 4)

    x = jax.random.normal(kx, (batch, input_size), dtype=jnp.float32)
    bound = 1.0 / jnp.sqrt(input_size)
    w = jax.random.uniform(kw, (output_size, input_size), jnp.float32, -bound, bound)
    b = jax.random.uniform(kb, (output_size,), jnp.float32, -bound, bound)
    target = jax.random.randint(kt, (batch,), 0, output_size, dtype=jnp.int32)

    # weight transpose / pad / bf16 cast hoisted and shared by both calls
    params = prepare_linear_params(w, b)

    # inference path: softmax probabilities
    probs = jax.block_until_ready(cross_entropy_model(x, params=params))
    # training path: cross-entropy loss (scalar, mean over batch)
    loss = jax.block_until_ready(cross_entropy_model(x, target=target, params=params))

    # plain-JAX reference using the same bf16-cast operands the MXU sees
    xb = x.astype(jnp.bfloat16).astype(jnp.float32)
    wb = w.astype(jnp.bfloat16).astype(jnp.float32)
    logits_ref = xb @ wb.T + b
    probs_ref = jax.nn.softmax(logits_ref, axis=-1)
    lse_ref = jax.nn.logsumexp(logits_ref, axis=-1)
    loss_ref = jnp.mean(lse_ref - logits_ref[jnp.arange(batch), target])

    assert probs.shape == (batch, output_size)
    assert jnp.allclose(probs, probs_ref, atol=2e-3), "softmax mismatch"
    assert jnp.allclose(jnp.sum(probs, axis=-1), 1.0, atol=1e-3), "probs not normalized"
    assert jnp.allclose(loss, loss_ref, atol=1e-3), "loss mismatch"

    print("KERNEL_OK")
</pallas_src>

<mosaic_0001>
module attributes {stable_mosaic.version = 11 : i64} {
  func.func @_softmax_kernel(%arg0: i32, %arg1: i32, %arg2: memref<8x128xbf16, #tpu.memory_space<vmem>>, %arg3: memref<128x128xbf16, #tpu.memory_space<vmem>>, %arg4: memref<1x128xf32, #tpu.memory_space<vmem>>, %arg5: memref<8x128xf32, #tpu.memory_space<vmem>>, %arg6: memref<8x128xf32, #tpu.memory_space<vmem>>) attributes {dimension_semantics = [#tpu.dimension_semantics<parallel>, #tpu.dimension_semantics<arbitrary>], iteration_bounds = array<i64: 1, 1>, scalar_prefetch = 0 : i64, scratch_operands = 1 : i64, tpu.core_type = #tpu.core_type<tc>, window_params = [{transform_indices = @transform_0, window_bounds = array<i64: 8, 128>}, {transform_indices = @transform_1, window_bounds = array<i64: 128, 128>}, {pipeline_mode = #tpu.pipeline_mode<synchronous>, transform_indices = @transform_2, window_bounds = array<i64: 1, 128>}, {transform_indices = @transform_3, window_bounds = array<i64: 8, 128>}]} {
    %c0_i32 = arith.constant 0 : i32
    %0 = arith.cmpi eq, %arg1, %c0_i32 : i32
    %1 = arith.extui %0 : i1 to i32
    %c0_i32_0 = arith.constant 0 : i32
    %2 = arith.cmpi ne, %1, %c0_i32_0 : i32
    scf.if %2 {
      %cst_10 = arith.constant 0.000000e+00 : f32
      %12 = vector.broadcast %cst_10 : f32 to vector<8x128xf32>
      %c0_11 = arith.constant 0 : index
      %c0_12 = arith.constant 0 : index
      %13 = vector.load %arg6[%c0_11, %c0_12] : memref<8x128xf32, #tpu.memory_space<vmem>>, vector<8x128xf32>
      tpu.vector_store %arg6[%c0_11, %c0_12], %12 {strides = array<i32>} : memref<8x128xf32, #tpu.memory_space<vmem>>, vector<8x128xf32>,
    } else {
    }
    %c0 = arith.constant 0 : index
    %c0_1 = arith.constant 0 : index
    %3 = vector.load %arg6[%c0, %c0_1] : memref<8x128xf32, #tpu.memory_space<vmem>>, vector<8x128xf32>
    %c0_2 = arith.constant 0 : index
    %c0_3 = arith.constant 0 : index
    %4 = vector.load %arg2[%c0_2, %c0_3] : memref<8x128xbf16, #tpu.memory_space<vmem>>, vector<8x128xbf16>
    %c0_4 = arith.constant 0 : index
    %c0_5 = arith.constant 0 : index
    %5 = vector.load %arg3[%c0_4, %c0_5] : memref<128x128xbf16, #tpu.memory_space<vmem>>, vector<128x128xbf16>
    %cst = arith.constant dense<0.000000e+00> : vector<8x128xf32>
    %6 = tpu.matmul %4, %5, %cst {dimension_numbers = #tpu.dot_dimension_numbers<[1], [0], [0], [1], [0, 0, 1, 1], [], []>} : vector<8x128xbf16>, vector<128x128xbf16>, vector<8x128xf32> -> vector<8x128xf32>
    %7 = arith.addf %3, %6 : vector<8x128xf32>
    %c0_6 = arith.constant 0 : index
    %c0_7 = arith.constant 0 : index
    %8 = vector.load %arg6[%c0_6, %c0_7] : memref<8x128xf32, #tpu.memory_space<vmem>>, vector<8x128xf32>
    tpu.vector_store %arg6[%c0_6, %c0_7], %7 {strides = array<i32>} : memref<8x128xf32, #tpu.memory_space<vmem>>, vector<8x128xf32>,
    %c0_i32_8 = arith.constant 0 : i32
    %9 = arith.cmpi eq, %arg1, %c0_i32_8 : i32
    %10 = arith.extui %9 : i1 to i32
    %c0_i32_9 = arith.constant 0 : i32
    %11 = arith.cmpi ne, %10, %c0_i32_9 : i32
    scf.if %11 {
      %c0_10 = arith.constant 0 : index
      %c0_11 = arith.constant 0 : index
      %12 = vector.load %arg6[%c0_10, %c0_11] : memref<8x128xf32, #tpu.memory_space<vmem>>, vector<8x128xf32>
      %c0_12 = arith.constant 0 : index
      %c0_13 = arith.constant 0 : index
      %13 = vector.load %arg4[%c0_12, %c0_13] : memref<1x128xf32, #tpu.memory_space<vmem>>, vector<1x128xf32>
      %14 = vector.broadcast %13 : vector<1x128xf32> to vector<8x128xf32>
      %15 = arith.addf %12, %14 : vector<8x128xf32>
      %cst_14 = arith.constant dense<0xFF800000> : vector<8xf32>
      %16 = vector.multi_reduction <maximumf>, %15, %cst_14 [1] : vector<8x128xf32> to vector<8xf32>
      %17 = vector.shape_cast %16 : vector<8xf32> to vector<8x1xf32>
      %18 = vector.broadcast %17 : vector<8x1xf32> to vector<8x128xf32>
      %19 = arith.subf %15, %18 : vector<8x128xf32>
      %20 = math.exp %19 : vector<8x128xf32>
      %cst_15 = arith.constant dense<0.000000e+00> : vector<8xf32>
      %21 = vector.multi_reduction <add>, %20, %cst_15 [1] : vector<8x128xf32> to vector<8xf32>
      %22 = vector.shape_cast %21 : vector<8xf32> to vector<8x1xf32>
      %23 = vector.broadcast %22 : vector<8x1xf32> to vector<8x128xf32>
      %24 = arith.divf %20, %23 : vector<8x128xf32>
      %c0_16 = arith.constant 0 : index
      %c0_17 = arith.constant 0 : index
      %25 = vector.load %arg5[%c0_16, %c0_17] : memref<8x128xf32, #tpu.memory_space<vmem>>, vector<8x128xf32>
      tpu.vector_store %arg5[%c0_16, %c0_17], %24 {strides = array<i32>} : memref<8x128xf32, #tpu.memory_space<vmem>>, vector<8x128xf32>,
    } else {
    }
    return
  }
  func.func @transform_0(%arg0: i32, %arg1: i32) -> (i32, i32) {
    %c0_i32 = arith.constant 0 : i32
    return %arg0, %arg1 : i32, i32
  }
  func.func @transform_1(%arg0: i32, %arg1: i32) -> (i32, i32) {
    %c0_i32 = arith.constant 0 : i32
    %c0_i32_0 = arith.constant 0 : i32
    return %arg1, %c0_i32 : i32, i32
  }
  func.func @transform_2(%arg0: i32, %arg1: i32) -> (i32, i32) {
    %c0_i32 = arith.constant 0 : i32
    %c0_i32_0 = arith.constant 0 : i32
    %c0_i32_1 = arith.constant 0 : i32
    return %c0_i32, %c0_i32_0 : i32, i32
  }
  func.func @transform_3(%arg0: i32, %arg1: i32) -> (i32, i32) {
    %c0_i32 = arith.constant 0 : i32
    %c0_i32_0 = arith.constant 0 : i32
    return %arg0, %c0_i32 : i32, i32
  }
}

</mosaic_0001>

<llo_original>
// kernel: tpu_custom_call.1
$region0: #{tpu_custom_call.1}
  #allocation0 [shape = 'u32[]', space=smem, size = 0x4, offset = 0x4, fixed_abs, tag = 'smem constant byte address 0x4 - core index']
  #allocation1 [shape = 'u32[144,128]{1,0:T(1,128)}', space=vmem, size = 0x12000, scoped, tag = 'internal scratch']
  #allocation2 [shape = 'f32[8,128]{1,0:T(8,128)}', space=vmem, size = 0x1000, scoped, tag = 'scratch operand']
  %s0 = inlined_call_operand.hbm [shape: bf16[8,128], index: 0, kind: input, shape index: {}]
  %s1 = inlined_call_operand.hbm [shape: bf16[128,128], index: 1, kind: input, shape index: {}]
  %s2 = inlined_call_operand.vmem [shape: f32[1,128], index: 2, kind: input, shape index: {}]
  %s3 = inlined_call_operand.hbm [shape: f32[8,128], index: 3, kind: output, shape index: {}]
  %s4 = sld [smem:[#allocation0]]
  $region38: #{tpu_custom_call.1} parent=0
    _
  %s6 = ssub.s32 1, %s4
  %s7 = scalar_select 0, %s6, %s4
  $region1: #{tpu_custom_call.1} parent=0
    #allocation3 [shape = 'u8[2048]{0}', space=vmem, size = 0x800, scoped, tag = 'input window, operand 0, single buffered']
    #allocation4 [shape = 's32[1]{0}', space=sflag, size = 0x4, scoped, tag = 'scoped memory for tpu_custom_call.1']
    #allocation5 [shape = 's32[1]{0}', space=sflag, size = 0x4, scoped, tag = 'scoped memory for tpu_custom_call.1']
    #allocation6 [shape = 'u8[32768]{0}', space=vmem, size = 0x8000, scoped, tag = 'input window, operand 1, single buffered']
    #allocation7 [shape = 's32[1]{0}', space=sflag, size = 0x4, scoped, tag = 'scoped memory for tpu_custom_call.1']
    #allocation8 [shape = 'u8[4096]{0}', space=vmem, size = 0x1000, scoped, tag = 'output window, operand 0, single buffered']
    %8 = vsyncpa [#allocation4], 0
    %9 = vsyncpa [#allocation7], 0
    %10 = vsyncpa [#allocation5], 0
    // Predicated region
    $region2: #{tpu_custom_call.1} parent=1 // pred_check
      _
    $region3: #{tpu_custom_call.1} parent=1 // pred_check_branch
      %12 = sbr.rel (0) target = $region5
    $region4: #{tpu_custom_call.1} parent=1 // pred_region
      %s14 = ssub.s32 64, 64
      %15 = vsyncadd [#allocation4], %s14
      %s17 = sshll.u32 [#allocation3], 4
      %s18 = int_to_ptr.vmem [resolvable:$true] %s17
      %20 = dma.hbm_to_vmem [thread:$0]  %s0, 64, %s18, [#allocation4]
    $region5: #{tpu_custom_call.1} parent=1 // pred_fallthru
      _
    // Predicated region
    $region6: #{tpu_custom_call.1} parent=1 // pred_check
      _
    $region7: #{tpu_custom_call.1} parent=1 // pred_check_branch
      %22 = sbr.rel (0) target = $region9
    $region8: #{tpu_custom_call.1} parent=1 // pred_region
      %s24 = ssub.s32 1024, 1024
      %25 = vsyncadd [#allocation7], %s24
      %s26 = sshll.u32 [#allocation6], 4
      %s27 = int_to_ptr.vmem [resolvable:$true] %s26
      %32 = dma.hbm_to_vmem [thread:$0]  %s1, 1024, %s27, [#allocation7], 64, 64, 4
    $region9: #{tpu_custom_call.1} parent=1 // pred_fallthru
      _
    // Predicated region
    $region10: #{tpu_custom_call.1} parent=1 // pred_check
      _
    $region11: #{tpu_custom_call.1} parent=1 // pred_check_branch
      %34 = sbr.rel (0) target = $region13
    $region12: #{tpu_custom_call.1} parent=1 // pred_region
      _
    $region13: #{tpu_custom_call.1} parent=1 // pred_fallthru
      _
    // Predicated region
    $region14: #{tpu_custom_call.1} parent=1 // pred_check
      _
    $region15: #{tpu_custom_call.1} parent=1 // pred_check_branch
      %36 = sbr.rel (0) target = $region17
    $region16: #{tpu_custom_call.1} parent=1 // pred_region
      %37 = dma.done [#allocation4], 64
    $region17: #{tpu_custom_call.1} parent=1 // pred_fallthru
      _
    // Predicated region
    $region18: #{tpu_custom_call.1} parent=1 // pred_check
      _
    $region19: #{tpu_custom_call.1} parent=1 // pred_check_branch
      %39 = sbr.rel (0) target = $region21
    $region20: #{tpu_custom_call.1} parent=1 // pred_region
      %40 = dma.done [#allocation7], 1024
    $region21: #{tpu_custom_call.1} parent=1 // pred_fallthru
      _
    %p42 = scmp.eq.s32.totalorder 0, 0
    // Predicated region
    $region22: #{tpu_custom_call.1} parent=1 // pred_check
      %p43 = pneg %p42
    $region23: #{tpu_custom_call.1} parent=1 // pred_check_branch
      %45 = sbr.rel (%p43) target = $region25
    $region24: #{tpu_custom_call.1} parent=1 // pred_region
      %46 = vst [vmem:[#allocation2] sm:$0xff] 0.0
    $region25: #{tpu_custom_call.1} parent=1 // pred_fallthru
      _
    %v47 = vld [vmem:[#allocation2] sm:$0xff]
    %v48 = vld [vmem:[#allocation3] sm:$0xf]
    %v49 = vld [vmem:[#allocation6] sm:$0xf]
    %v50 = vld [vmem:[#allocation6 + $0x4] sm:$0xf]
    %v51 = vld [vmem:[#allocation6 + $0x8] sm:$0xf]
    %v52 = vld [vmem:[#allocation6 + $0xc] sm:$0xf]
    %v53 = vld [vmem:[#allocation6 + $0x10] sm:$0xf]
    %v54 = vld [vmem:[#allocation6 + $0x14] sm:$0xf]
    %v55 = vld [vmem:[#allocation6 + $0x18] sm:$0xf]
    %v56 = vld [vmem:[#allocation6 + $0x1c] sm:$0xf]
    %v57 = vld [vmem:[#allocation6 + $0x20] sm:$0xf]
    %v58 = vld [vmem:[#allocation6 + $0x24] sm:$0xf]
    %v59 = vld [vmem:[#allocation6 + $0x28] sm:$0xf]
    %v60 = vld [vmem:[#allocation6 + $0x2c] sm:$0xf]
    %v61 = vld [vmem:[#allocation6 + $0x30] sm:$0xf]
    %v62 = vld [vmem:[#allocation6 + $0x34] sm:$0xf]
    %v63 = vld [vmem:[#allocation6 + $0x38] sm:$0xf]
    %v64 = vld [vmem:[#allocation6 + $0x3c] sm:$0xf]
    %v81 = vunpack.c.l.b16 %v49
    %v82 = vunpack.c.l.b16 %v50
    %v83 = vunpack.c.l.b16 %v51
    %v84 = vunpack.c.l.b16 %v52
    %v85 = vunpack.c.l.b16 %v53
    %v86 = vunpack.c.l.b16 %v54
    %v87 = vunpack.c.l.b16 %v55
    %v88 = vunpack.c.l.b16 %v56
    %v89 = vunpack.c.l.b16 %v57
    %v90 = vunpack.c.l.b16 %v58
    %v91 = vunpack.c.l.b16 %v59
    %v92 = vunpack.c.l.b16 %v60
    %v93 = vunpack.c.l.b16 %v61
    %v94 = vunpack.c.l.b16 %v62
    %v95 = vunpack.c.l.b16 %v63
    %v96 = vunpack.c.l.b16 %v64
    %v97 = vpack.c.b16 %v82, %v81
    %v98 = vpack.c.b16 %v84, %v83
    %v99 = vpack.c.b16 %v86, %v85
    %v100 = vpack.c.b16 %v88, %v87
    %v101 = vpack.c.b16 %v90, %v89
    %v102 = vpack.c.b16 %v92, %v91
    %v103 = vpack.c.b16 %v94, %v93
    %v104 = vpack.c.b16 %v96, %v95
    %113 = vmatprep.subr.bf16.mxu0 0
    %114 = vmatpush1.bf16.msra.mxu0 %v104
    %115 = vmatprep.subr.bf16.mxu0 0
    %116 = vmatpush1.bf16.msra.mxu0 %v103
    %117 = vmatprep.subr.bf16.mxu0 0
    %118 = vmatpush1.bf16.msra.mxu0 %v102
    %119 = vmatprep.subr.bf16.mxu0 0
    %120 = vmatpush1.bf16.msra.mxu0 %v101
    %121 = vmatprep.subr.bf16.mxu0 0
    %122 = vmatpush1.bf16.msra.mxu0 %v100
    %123 = vmatprep.subr.bf16.mxu0 0
    %124 = vmatpush1.bf16.msra.mxu0 %v99
    %125 = vmatprep.subr.bf16.mxu0 0
    %126 = vmatpush1.bf16.msra.mxu0 %v98
    %127 = vmatprep.subr.bf16.mxu0 0
    %128 = vmatpush1.bf16.msra.mxu0 %v97
    %129 = vmatprep.subr.bf16.mxu0 0
    %130 = vmatpush2.bf16.msra.mxu0 0
    %131 = vmatprep.subr.bf16.mxu0 0
    %132 = vmatpush2.bf16.msra.mxu0 0
    %133 = vmatprep.subr.bf16.mxu0 0
    %134 = vmatpush2.bf16.msra.mxu0 0
    %135 = vmatprep.subr.bf16.mxu0 0
    %136 = vmatpush2.bf16.msra.mxu0 0
    %137 = vmatprep.subr.bf16.mxu0 0
    %138 = vmatpush2.bf16.msra.mxu0 0
    %139 = vmatprep.subr.bf16.mxu0 0
    %140 = vmatpush2.bf16.msra.mxu0 0
    %141 = vmatprep.subr.bf16.mxu0 0
    %142 = vmatpush2.bf16.msra.mxu0 0
    %143 = vmatprep.subr.bf16.mxu0 0
    %144 = vmatpush2.bf16.msra.mxu0 0
    %145 = vmatprep.mubr.bf16.mxu0 0
    %146 = vmatmul.mubr.bf16.gmra.mxu0 %v48
    %v147 = vpop.f32.mrf.mxu0
    %v148 = vadd.f32 0.0, %v147
    %v149 = vpop.f32.mrf.mxu0
    %v150 = vpop.f32.mrf.mxu0
    %v151 = vpop.f32.mrf.mxu0
    %152 = vdwg.mxu0
    %v153 = vadd.f32 %v47, %v148
    %154 = vst [vmem:[#allocation2] sm:$0xff] %v153
    // Predicated region
    $region26: #{tpu_custom_call.1} parent=1 // pred_check
      %p155 = pneg %p42
    $region27: #{tpu_custom_call.1} parent=1 // pred_check_branch
      %157 = sbr.rel (%p155) target = $region29
    $region28: #{tpu_custom_call.1} parent=1 // pred_region
      %v158 = vld [vmem:[#allocation2] sm:$0xff]
      %v159 = vld [vmem:[%s2] sm:$0x1]
      %v161 = vlaneseq
      %v162 = vshrl.u32 %v161, 7
      %v163 = vsub.s32 0, %v162
      %v164 = vrot.slane %v159, %v163
      %v166 = vadd.f32 %v158, %v164
      %167 = vmax.xlane.f32.xlu0 %v166
      %v168 = vpop.xlane.xlu0 %167
      %v169 = vsub.f32 %v166, %v168
      %v170 = vmul.f32 %v169, 1.442695
      %v171 = vpow.pop %v170
      %172 = vadd.xlane.f32.xlu0 %v171
      %v173 = vpop.xlane.xlu0 %172
      %v174 = vrcp.pop %v173
      %v175 = vmul.f32 %v171, %v174
      %176 = vst [vmem:[#allocation8] sm:$0xff] %v175
    $region29: #{tpu_custom_call.1} parent=1 // pred_fallthru
      _
    // Predicated region
    $region30: #{tpu_custom_call.1} parent=1 // pred_check
      _
    $region31: #{tpu_custom_call.1} parent=1 // pred_check_branch
      %178 = sbr.rel (0) target = $region33
    $region32: #{tpu_custom_call.1} parent=1 // pred_region
      %s180 = ssub.s32 128, 128
      %181 = vsyncadd [#allocation5], %s180
      %s183 = sshll.u32 [#allocation8], 4
      %s184 = int_to_ptr.vmem [resolvable:$true] %s183
      %186 = dma.vmem_to_hbm [thread:$0]  %s184, 128, %s3, [#allocation5]
    $region33: #{tpu_custom_call.1} parent=1 // pred_fallthru
      _
    // Predicated region
    $region34: #{tpu_custom_call.1} parent=1 // pred_check
      _
    $region35: #{tpu_custom_call.1} parent=1 // pred_check_branch
      %188 = sbr.rel (0) target = $region37
    $region36: #{tpu_custom_call.1} parent=1 // pred_region
      %189 = dma.done [#allocation5], 128
    $region37: #{tpu_custom_call.1} parent=1 // pred_fallthru
      _
    %190 = vsyncpa [#allocation4], 1
    %191 = vsyncpa [#allocation7], 1
    %192 = vsyncpa [#allocation5], 1

</llo_original>
